<compile_context>
chip_gen: v5e
topology: v5e:2x2
jax: 0.10.0
libtpu: 0.0.40
codegen_flags: <defaults>
</compile_context>

<pallas_src>
import functools

import jax
import jax.numpy as jnp
from jax import lax
from jax.experimental import pallas as pl
from jax.experimental.pallas import tpu as pltpu


def _round_up(x, m):
    return ((x + m - 1) // m) * m


def _cdiv(a, b):
    return (a + b - 1) // b


# x (m, K) contracted with w (n, K) over the last axes -> (m, n).  This is the
# "NT" layout that consumes the PyTorch (N, K) weight without a transpose.
_NT_DIMS = (((1,), (1,)), ((), ()))


# ---------------------------------------------------------------------------
# Fast path: the whole (padded) problem fits comfortably in VMEM, so run it as
# a single un-gridded block: one MXU matmul + bias add.
# ---------------------------------------------------------------------------
def _linear_single_block_kernel(x_ref, w_ref, b_ref, o_ref, *, use_bf16):
    x = x_ref[...]
    w = w_ref[...]
    if use_bf16:  # v6e/v7x: bf16-native MXU, keep f32 accumulation
        x = x.astype(jnp.bfloat16)
        w = w.astype(jnp.bfloat16)
    acc = lax.dot_general(x, w, _NT_DIMS, preferred_element_type=jnp.float32)
    o_ref[...] = (acc + b_ref[...]).astype(o_ref.dtype)


def _pre_layer_small(x, w, b2d, *, use_bf16):
    Bp, _ = x.shape
    Np, _ = w.shape
    return pl.pallas_call(
        functools.partial(_linear_single_block_kernel, use_bf16=use_bf16),
        out_shape=jax.ShapeDtypeStruct((Bp, Np), jnp.float32),
    )(x, w, b2d)


# ---------------------------------------------------------------------------
# General path: (M, N) parallel tiles, K reduction axis last ("arbitrary").
# The output is f32, so partial products accumulate straight into the
# VMEM-resident output block (constant block index across the K axis).
# ---------------------------------------------------------------------------
def _linear_tiled_kernel(x_ref, w_ref, b_ref, o_ref, *, use_bf16):
    k = pl.program_id(2)

    x = x_ref[...]
    w = w_ref[...]
    if use_bf16:
        x = x.astype(jnp.bfloat16)
        w = w.astype(jnp.bfloat16)
    part = lax.dot_general(x, w, _NT_DIMS, preferred_element_type=jnp.float32)

    @pl.when(k == 0)
    def _():
        # First K step: single write of (bias + partial) -- when the K grid is
        # collapsed to 1 step this is the only store (no RMW at all).
        o_ref[...] = part + b_ref[...]

    @pl.when(k != 0)
    def _():
        o_ref[...] += part


def _pre_layer_tiled(x, w, b2d, *, tm, tn, tk, use_bf16):
    Bp, Kp = x.shape
    Np, _ = w.shape
    assert Bp % tm == 0 and Np % tn == 0 and Kp % tk == 0

    return pl.pallas_call(
        functools.partial(_linear_tiled_kernel, use_bf16=use_bf16),
        out_shape=jax.ShapeDtypeStruct((Bp, Np), jnp.float32),
        grid_spec=pltpu.PrefetchScalarGridSpec(
            num_scalar_prefetch=0,
            grid=(Bp // tm, Np // tn, Kp // tk),
            in_specs=[
                # activations, (B, K) layout
                pl.BlockSpec((tm, tk), lambda i, j, k: (i, k)),
                # weight kept in PyTorch (N, K) layout -- no wrapper transpose
                pl.BlockSpec((tn, tk), lambda i, j, k: (j, k)),
                # bias stripe; constant across i and k
                pl.BlockSpec((1, tn), lambda i, j, k: (0, j)),
            ],
            out_specs=pl.BlockSpec((tm, tn), lambda i, j, k: (i, j)),
        ),
        compiler_params=pltpu.CompilerParams(
            # M and N tiles are independent -> megacore-shardable (v7x 2 TCs);
            # K is the reduction axis -> arbitrary, placed last.
            dimension_semantics=("parallel", "parallel", "arbitrary"),
            vmem_limit_bytes=32 << 20,
        ),
    )(x, w, b2d)


def _choose_tiles(B, N, K, itemsize):
    # N tile: lane-dense multiple of 128; 256 matches v6e/v7x MXU geometry.
    tn = 256 if N > 128 else 128
    Np = _round_up(N, tn)
    n_tiles_n = Np // tn

    # M tile.
    Bp = _round_up(B, 8)
    tm = min(256, Bp)
    # v7x megacore: keep >= 2 parallel tiles when the batch allows it.
    if n_tiles_n * _cdiv(Bp, tm) < 2 and Bp > 8:
        tm = max(8, _round_up(_cdiv(Bp, 2), 8))
    Bp = _round_up(B, tm)

    # K tile: collapse the whole reduction into a single grid step when the
    # double-buffered x/w stripes stay within a few MiB of VMEM (typical
    # classifier-head K); otherwise stream in 512-wide chunks.
    Kp128 = _round_up(K, 128)
    if Kp128 * (tm + tn) * itemsize <= (6 << 20):
        tk = Kp128
    else:
        tk = 512
    Kp = _round_up(K, tk)

    # Double-buffered inputs + resident output tile must fit every chip's VMEM
    # (v7x scoped default 32 MiB, v5e 16 MiB -- we raise the limit to 32 MiB).
    footprint = 2 * (tm * tk + tn * tk) * itemsize + tm * tn * 4 + 2 * tn * 4
    assert footprint <= (24 << 20), footprint
    return tm, tn, tk, Bp, Np, Kp


# ---------------------------------------------------------------------------
# Public wrapper: PyTorch-equivalent forward of Pre_Layer.
# ---------------------------------------------------------------------------
def pre_layer_forward(
    data,
    weight,
    bias,
    *,
    use_bf16_inputs=False,
    force_tiled=False,
    small_bytes_limit=4 << 20,
):
    """data: (B, K), weight: (N, K) (PyTorch layout), bias: (N,).

    Returns (B, N) == data @ weight.T + bias, in data.dtype.
    """
    B, K = data.shape
    N, Kw = weight.shape
    assert K == Kw and bias.shape == (N,)
    out_dtype = data.dtype
    itemsize = jnp.dtype(data.dtype).itemsize

    # Lane/sublane-dense padding (sliced off at the end; zero pad is inert).
    Bp = _round_up(B, 8)
    Np = _round_up(N, 128)
    Kp = _round_up(K, 128)
    total_bytes = (Bp * Kp + Np * Kp + Np) * itemsize + Bp * Np * 4

    if (not force_tiled) and total_bytes <= small_bytes_limit:
        xp = jnp.pad(data, ((0, Bp - B), (0, Kp - K)))
        wp = jnp.pad(weight, ((0, Np - N), (0, Kp - K)))
        bp = jnp.pad(bias, (0, Np - N)).reshape(1, Np)
        out = _pre_layer_small(xp, wp, bp, use_bf16=use_bf16_inputs)
    else:
        tm, tn, tk, Bp, Np, Kp = _choose_tiles(B, N, K, itemsize)
        xp = jnp.pad(data, ((0, Bp - B), (0, Kp - K)))
        wp = jnp.pad(weight, ((0, Np - N), (0, Kp - K)))
        bp = jnp.pad(bias, (0, Np - N)).reshape(1, Np)
        out = _pre_layer_tiled(xp, wp, bp, tm=tm, tn=tn, tk=tk,
                               use_bf16=use_bf16_inputs)

    return out[:B, :N].astype(out_dtype)


# jit so the pads / final slice fuse (on aligned real shapes they are no-ops)
# and the whole forward dispatches as one executable.
pre_layer_forward_jit = jax.jit(
    pre_layer_forward,
    static_argnames=("use_bf16_inputs", "force_tiled", "small_bytes_limit"),
)


if __name__ == "__main__":
    # Small shapes consistent with the module: Linear(inputdim -> nb_class)
    B, INPUTDIM, NB_CLASS = 8, 256, 64

    key = jax.random.PRNGKey(0)
    k_x, k_w, k_b = jax.random.split(key, 3)

    data = jax.random.normal(k_x, (B, INPUTDIM), dtype=jnp.float32)
    # PyTorch stores the Linear weight as (nb_class, inputdim).
    weight = jax.random.normal(k_w, (NB_CLASS, INPUTDIM), dtype=jnp.float32) * 0.02
    bias = jax.random.normal(k_b, (NB_CLASS,), dtype=jnp.float32) * 0.02

    ref = data @ weight.T + bias

    # Fast path: single un-gridded VMEM block (default for this tiny shape).
    out = jax.block_until_ready(pre_layer_forward_jit(data, weight, bias))
    assert out.shape == (B, NB_CLASS)
    assert out.dtype == data.dtype
    assert jnp.allclose(out, ref, atol=1e-4, rtol=1e-4)

    # Also exercise the general tiled path (the one used for real shapes).
    out_tiled = jax.block_until_ready(
        pre_layer_forward_jit(data, weight, bias, force_tiled=True)
    )
    assert jnp.allclose(out_tiled, ref, atol=1e-4, rtol=1e-4)

    print("KERNEL_OK")
</pallas_src>

<mosaic_0001>
module attributes {stable_mosaic.version = 11 : i64} {
  func.func @_linear_single_block_kernel(%arg0: memref<8x256xf32, #tpu.memory_space<vmem>>, %arg1: memref<128x256xf32, #tpu.memory_space<vmem>>, %arg2: memref<1x128xf32, #tpu.memory_space<vmem>>, %arg3: memref<8x128xf32, #tpu.memory_space<vmem>>) attributes {dimension_semantics = [], scalar_prefetch = 0 : i64, scratch_operands = 0 : i64, tpu.core_type = #tpu.core_type<tc>} {
    %c0 = arith.constant 0 : index
    %c0_0 = arith.constant 0 : index
    %0 = vector.load %arg0[%c0, %c0_0] : memref<8x256xf32, #tpu.memory_space<vmem>>, vector<8x256xf32>
    %c0_1 = arith.constant 0 : index
    %c0_2 = arith.constant 0 : index
    %1 = vector.load %arg1[%c0_1, %c0_2] : memref<128x256xf32, #tpu.memory_space<vmem>>, vector<128x256xf32>
    %cst = arith.constant dense<0.000000e+00> : vector<8x128xf32>
    %2 = tpu.matmul %0, %1, %cst {dimension_numbers = #tpu.dot_dimension_numbers<[1], [1], [0], [0], [0, 0, 1, 0], [], []>} : vector<8x256xf32>, vector<128x256xf32>, vector<8x128xf32> -> vector<8x128xf32>
    %c0_3 = arith.constant 0 : index
    %c0_4 = arith.constant 0 : index
    %3 = vector.load %arg2[%c0_3, %c0_4] : memref<1x128xf32, #tpu.memory_space<vmem>>, vector<1x128xf32>
    %4 = vector.broadcast %3 : vector<1x128xf32> to vector<8x128xf32>
    %5 = arith.addf %2, %4 : vector<8x128xf32>
    %c0_5 = arith.constant 0 : index
    %c0_6 = arith.constant 0 : index
    %6 = vector.load %arg3[%c0_5, %c0_6] : memref<8x128xf32, #tpu.memory_space<vmem>>, vector<8x128xf32>
    tpu.vector_store %arg3[%c0_5, %c0_6], %5 {strides = array<i32>} : memref<8x128xf32, #tpu.memory_space<vmem>>, vector<8x128xf32>,
    return
  }
}

</mosaic_0001>

<llo_original>
// kernel: pre_layer_forward.1
$region0: #{pre_layer_forward.1}
  #allocation0 [shape = 'u32[]', space=smem, size = 0x4, offset = 0x4, fixed_abs, tag = 'smem constant byte address 0x4 - core index']
  #allocation1 [shape = 'u32[72,128]{1,0:T(1,128)}', space=vmem, size = 0x9000, scoped, tag = 'internal scratch']
  %s0 = inlined_call_operand.vmem [shape: f32[8,256], index: 0, kind: input, shape index: {}]
  %s1 = inlined_call_operand.vmem [shape: f32[128,256], index: 1, kind: input, shape index: {}]
  %s2 = inlined_call_operand.vmem [shape: f32[1,128], index: 2, kind: input, shape index: {}]
  %s3 = inlined_call_operand.hbm [shape: f32[8,128], index: 3, kind: output, shape index: {}]
  %s4 = sld [smem:[#allocation0]]
  $region22: #{pre_layer_forward.1} parent=0
    _
  %s6 = ssub.s32 1, %s4
  %s7 = scalar_select 0, %s6, %s4
  $region1: #{pre_layer_forward.1} parent=0
    #allocation2 [shape = 'u8[4096]{0}', space=vmem, size = 0x1000, scoped, tag = 'output window, operand 0, single buffered']
    #allocation3 [shape = 's32[1]{0}', space=sflag, size = 0x4, scoped, tag = 'scoped memory for pre_layer_forward.1']
    %8 = vsyncpa [#allocation3], 0
    // Predicated region
    $region2: #{pre_layer_forward.1} parent=1 // pred_check
      _
    $region3: #{pre_layer_forward.1} parent=1 // pred_check_branch
      %10 = sbr.rel (0) target = $region5
    $region4: #{pre_layer_forward.1} parent=1 // pred_region
      _
    $region5: #{pre_layer_forward.1} parent=1 // pred_fallthru
      _
    // Predicated region
    $region6: #{pre_layer_forward.1} parent=1 // pred_check
      _
    $region7: #{pre_layer_forward.1} parent=1 // pred_check_branch
      %12 = sbr.rel (0) target = $region9
    $region8: #{pre_layer_forward.1} parent=1 // pred_region
      _
    $region9: #{pre_layer_forward.1} parent=1 // pred_fallthru
      _
    // Predicated region
    $region10: #{pre_layer_forward.1} parent=1 // pred_check
      _
    $region11: #{pre_layer_forward.1} parent=1 // pred_check_branch
      %14 = sbr.rel (0) target = $region13
    $region12: #{pre_layer_forward.1} parent=1 // pred_region
      _
    $region13: #{pre_layer_forward.1} parent=1 // pred_fallthru
      _
    %v15 = vld [vmem:[%s0] sm:$0xff]
    %v16 = vld [vmem:[%s0 + $0x8] sm:$0xff]
    %v17 = vld [vmem:[%s1] sm:$0xff]
    %v18 = vld [vmem:[%s1 + $0x8] sm:$0xff]
    %v19 = vld [vmem:[%s1 + $0x10] sm:$0xff]
    %v20 = vld [vmem:[%s1 + $0x18] sm:$0xff]
    %v21 = vld [vmem:[%s1 + $0x20] sm:$0xff]
    %v22 = vld [vmem:[%s1 + $0x28] sm:$0xff]
    %v23 = vld [vmem:[%s1 + $0x30] sm:$0xff]
    %v24 = vld [vmem:[%s1 + $0x38] sm:$0xff]
    %v25 = vld [vmem:[%s1 + $0x40] sm:$0xff]
    %v26 = vld [vmem:[%s1 + $0x48] sm:$0xff]
    %v27 = vld [vmem:[%s1 + $0x50] sm:$0xff]
    %v28 = vld [vmem:[%s1 + $0x58] sm:$0xff]
    %v29 = vld [vmem:[%s1 + $0x60] sm:$0xff]
    %v30 = vld [vmem:[%s1 + $0x68] sm:$0xff]
    %v31 = vld [vmem:[%s1 + $0x70] sm:$0xff]
    %v32 = vld [vmem:[%s1 + $0x78] sm:$0xff]
    %v33 = vld [vmem:[%s1 + $0x80] sm:$0xff]
    %v34 = vld [vmem:[%s1 + $0x88] sm:$0xff]
    %v35 = vld [vmem:[%s1 + $0x90] sm:$0xff]
    %v36 = vld [vmem:[%s1 + $0x98] sm:$0xff]
    %v37 = vld [vmem:[%s1 + $0xa0] sm:$0xff]
    %v38 = vld [vmem:[%s1 + $0xa8] sm:$0xff]
    %v39 = vld [vmem:[%s1 + $0xb0] sm:$0xff]
    %v40 = vld [vmem:[%s1 + $0xb8] sm:$0xff]
    %v41 = vld [vmem:[%s1 + $0xc0] sm:$0xff]
    %v42 = vld [vmem:[%s1 + $0xc8] sm:$0xff]
    %v43 = vld [vmem:[%s1 + $0xd0] sm:$0xff]
    %v44 = vld [vmem:[%s1 + $0xd8] sm:$0xff]
    %v45 = vld [vmem:[%s1 + $0xe0] sm:$0xff]
    %v46 = vld [vmem:[%s1 + $0xe8] sm:$0xff]
    %v47 = vld [vmem:[%s1 + $0xf0] sm:$0xff]
    %v48 = vld [vmem:[%s1 + $0xf8] sm:$0xff]
    %v49 = vld [vmem:[%s2] sm:$0x1]
    %v51 = vperm.slane %v49, 0
    %53 = vmatpush.xpose.msra.mxu0 %v47
    %54 = vmatpush.xpose.msra.mxu0 %v45
    %55 = vmatpush.xpose.msra.mxu0 %v43
    %56 = vmatpush.xpose.msra.mxu0 %v41
    %57 = vmatpush.xpose.msra.mxu0 %v39
    %58 = vmatpush.xpose.msra.mxu0 %v37
    %59 = vmatpush.xpose.msra.mxu0 %v35
    %60 = vmatpush.xpose.msra.mxu0 %v33
    %61 = vmatpush.xpose.msra.mxu0 %v31
    %62 = vmatpush.xpose.msra.mxu0 %v29
    %63 = vmatpush.xpose.msra.mxu0 %v27
    %64 = vmatpush.xpose.msra.mxu0 %v25
    %65 = vmatpush.xpose.msra.mxu0 %v23
    %66 = vmatpush.xpose.msra.mxu0 %v21
    %67 = vmatpush.xpose.msra.mxu0 %v19
    %68 = vmatpush.xpose.msra.mxu0 %v17
    %69 = vmatmul.f32.gmra.mxu0 %v15
    %v70 = vpop.f32.mrf.mxu0
    %v71 = vadd.f32 %v51, %v70
    %72 = vdwg.mxu0
    %73 = vmatpush.xpose.msra.mxu0 %v48
    %74 = vmatpush.xpose.msra.mxu0 %v46
    %75 = vmatpush.xpose.msra.mxu0 %v44
    %76 = vmatpush.xpose.msra.mxu0 %v42
    %77 = vmatpush.xpose.msra.mxu0 %v40
    %78 = vmatpush.xpose.msra.mxu0 %v38
    %79 = vmatpush.xpose.msra.mxu0 %v36
    %80 = vmatpush.xpose.msra.mxu0 %v34
    %81 = vmatpush.xpose.msra.mxu0 %v32
    %82 = vmatpush.xpose.msra.mxu0 %v30
    %83 = vmatpush.xpose.msra.mxu0 %v28
    %84 = vmatpush.xpose.msra.mxu0 %v26
    %85 = vmatpush.xpose.msra.mxu0 %v24
    %86 = vmatpush.xpose.msra.mxu0 %v22
    %87 = vmatpush.xpose.msra.mxu0 %v20
    %88 = vmatpush.xpose.msra.mxu0 %v18
    %89 = vmatmul.f32.gmra.mxu0 %v16
    %v90 = vpop.f32.mrf.mxu0
    %v91 = vadd.f32 %v71, %v90
    %92 = vdwg.mxu0
    %93 = vst [vmem:[#allocation2] sm:$0xff] %v91
    // Predicated region
    $region14: #{pre_layer_forward.1} parent=1 // pred_check
      _
    $region15: #{pre_layer_forward.1} parent=1 // pred_check_branch
      %95 = sbr.rel (0) target = $region17
    $region16: #{pre_layer_forward.1} parent=1 // pred_region
      %97 = vsyncadd [#allocation3], 0
      %s99 = sshll.u32 [#allocation2], 4
      %s100 = int_to_ptr.vmem [resolvable:$true] %s99
      %s101 = sshll.u32 %s3, 4
      %s102 = int_to_ptr.hbm [resolvable:$true] %s101
      %104 = dma.vmem_to_hbm [thread:$0]  %s100, 128, %s102, [#allocation3]
    $region17: #{pre_layer_forward.1} parent=1 // pred_fallthru
      _
    // Predicated region
    $region18: #{pre_layer_forward.1} parent=1 // pred_check
      _
    $region19: #{pre_layer_forward.1} parent=1 // pred_check_branch
      %106 = sbr.rel (0) target = $region21
    $region20: #{pre_layer_forward.1} parent=1 // pred_region
      %108 = dma.done [#allocation3], 128
    $region21: #{pre_layer_forward.1} parent=1 // pred_fallthru
      _
    %109 = vsyncpa [#allocation3], 1

</llo_original>
